<compile_context>
chip_gen: v5e
topology: v5e:2x2
jax: 0.10.0
libtpu: 0.0.40
codegen_flags: <defaults>
</compile_context>

<pallas_src>
import functools

import jax
import jax.numpy as jnp
import numpy as np
from jax.experimental import pallas as pl
from jax.experimental.pallas import tpu as pltpu

# --- model config (synthetic, matches Q_NET.__init__ shapes) ---
STATE_DIM = 7            # env.state_dim (synthetic choice)
IN_DIM = STATE_DIM + 1   # concat(s, a) along feature axis -> 8
H1, H2, H3, OUT = 64, 128, 128, 1
H1P = 128                # H1 zero-padded to a full 128-lane tile (numerically identical)


def _round_up(x, m):
    return -(-x // m) * m


def _xavier_uniform(key, shape, gain):
    din, dout = shape
    bound = gain * np.sqrt(6.0 / (din + dout))
    return jax.random.uniform(key, shape, dtype=jnp.float32, minval=-bound, maxval=bound)


def init_params(key):
    gain = float(np.sqrt(2.0))  # calculate_gain('relu')
    k1, k2, k3, k4 = jax.random.split(key, 4)
    return {
        "w1": _xavier_uniform(k1, (IN_DIM, H1), gain),
        "b1": jnp.zeros((1, H1), jnp.float32),
        "w2": _xavier_uniform(k2, (H1, H2), gain),
        "b2": jnp.zeros((1, H2), jnp.float32),
        "w3": _xavier_uniform(k3, (H2, H3), gain),
        "b3": jnp.zeros((1, H3), jnp.float32),
        "w4": _xavier_uniform(k4, (H3, OUT), gain),
        "b4": jnp.zeros((1, OUT), jnp.float32),
    }


def _prepare_kernel_operands(params, compute_dtype):
    """Pad H1->128, keep W1 as a single (8, 128) operand, stack all biases (4, 128)."""
    w1 = jnp.pad(params["w1"], ((0, 0), (0, H1P - H1))).astype(compute_dtype)   # (8, 128)
    w2 = jnp.pad(params["w2"], ((0, H1P - H1), (0, 0))).astype(compute_dtype)   # (128, 128)
    w3 = params["w3"].astype(compute_dtype)                                      # (128, 128)
    w4 = params["w4"].astype(compute_dtype)                                      # (128, 1)
    b = jnp.concatenate(
        [jnp.pad(params["b1"], ((0, 0), (0, H1P - H1))),   # row 0: b1 (padded)
         params["b2"],                                      # row 1: b2
         params["b3"],                                      # row 2: b3
         jnp.pad(params["b4"], ((0, 0), (0, H2 - OUT)))],   # row 3: b4 at column 0
        axis=0)                                             # (4, 128) f32
    return w1, w2, w3, w4, b


def qnet_kernel(x_ref, w1_ref, w2_ref, w3_ref, w4_ref, b_ref, out_ref):
    cdt = w2_ref.dtype           # compute dtype for MXU operands (bf16 or f32)
    f32 = jnp.float32

    # Layer 1: single K=8 MXU matmul on the fused (s||a) operand, f32 accumulate.
    h = jnp.dot(x_ref[...], w1_ref[...], preferred_element_type=f32)
    h = jnp.maximum(h + b_ref[0:1, :], 0.0)                          # (TM, 128)

    # Layers 2 / 3
    h = jnp.dot(h.astype(cdt), w2_ref[...], preferred_element_type=f32)
    h = jnp.maximum(h + b_ref[1:2, :], 0.0)                          # (TM, 128)
    h = jnp.dot(h.astype(cdt), w3_ref[...], preferred_element_type=f32)
    h = jnp.maximum(h + b_ref[2:3, :], 0.0)                          # (TM, 128)

    # Output layer: natural (TM,128)x(128,1) matmul -> no transpose of h anywhere.
    q = jnp.dot(h.astype(cdt), w4_ref[...], preferred_element_type=f32)
    out_ref[...] = q + b_ref[3:4, 0:1]                               # (TM, 1)


@functools.partial(jax.jit, static_argnames=("compute_dtype", "tile_m"))
def qnet_forward(params, s, a, *, compute_dtype=jnp.bfloat16, tile_m=1024):
    """s: (B, STATE_DIM), a: (B, 1) -> Q: (B, 1) float32."""
    B = s.shape[0]

    # Fused concat(s, a) -> (B, 8): one input DMA stream, one K=8 MXU matmul in-kernel.
    x = jnp.concatenate([s, a], axis=1).astype(compute_dtype)

    # Tile selection: multiple of 16 (bf16 sublane packing); big tiles amortize the
    # per-grid-step overhead, but cap so num_tiles >= 2 on non-tiny batches (v7x has
    # 2 TensorCores and the "parallel" batch axis only shards across >= 2 grid steps).
    B16 = _round_up(B, 16)
    if B16 <= 32:
        TM = B16
    else:
        TM = max(16, min(int(tile_m), _round_up(-(-B16 // 2), 16)))
    num_tiles = -(-B // TM)
    B_pad = num_tiles * TM
    pad = B_pad - B

    x_p = jnp.pad(x, ((0, pad), (0, 0)))
    w1, w2, w3, w4, b = _prepare_kernel_operands(params, compute_dtype)

    def batch_spec(cols):
        return pl.BlockSpec((TM, cols), lambda i: (i, 0))

    def const_spec(shape):
        return pl.BlockSpec(shape, lambda i: (0, 0))   # resident: DMA'd once, never re-fetched

    # Advisory cost hint for XLA's scheduler around the custom call.
    flops = 2 * B_pad * (IN_DIM * H1P + H1P * H2 + H2 * H3 + H3 * OUT)
    bytes_accessed = (
        x_p.size * x_p.dtype.itemsize + B_pad * 4
        + sum(int(np.prod(w.shape)) * w.dtype.itemsize for w in (w1, w2, w3, w4))
        + b.size * 4)

    cp_kwargs = dict(dimension_semantics=("parallel",))
    if TM > 2048:
        # Very large tiles can exceed v5e's 16 MiB scoped-VMEM default; raise explicitly.
        cp_kwargs["vmem_limit_bytes"] = 48 * 1024 * 1024

    out = pl.pallas_call(
        qnet_kernel,
        out_shape=jax.ShapeDtypeStruct((B_pad, OUT), jnp.float32),
        grid_spec=pltpu.PrefetchScalarGridSpec(
            num_scalar_prefetch=0,
            grid=(num_tiles,),
            in_specs=[
                batch_spec(IN_DIM),             # x = (s||a) tile, (TM, 8)
                const_spec((IN_DIM, H1P)),      # w1 (padded to 128 cols)
                const_spec((H1P, H2)),          # w2 (padded rows)
                const_spec((H2, H3)),           # w3
                const_spec((H3, OUT)),          # w4
                const_spec((4, H2)),            # b1..b3 + b4 stacked
            ],
            out_specs=pl.BlockSpec((TM, OUT), lambda i: (i, 0)),
        ),
        compiler_params=pltpu.CompilerParams(**cp_kwargs),
        cost_estimate=pl.CostEstimate(flops=flops, transcendentals=0,
                                      bytes_accessed=bytes_accessed),
    )(x_p, w1, w2, w3, w4, b)

    return out[:B]


def qnet_reference(params, s, a):
    """Pure-JAX reference matching the PyTorch forward (f32, high-precision matmuls)."""
    hp = jax.lax.Precision.HIGHEST
    x = jnp.concatenate([s, a], axis=1).astype(jnp.float32)
    h = jnp.maximum(jnp.dot(x, params["w1"], precision=hp) + params["b1"], 0.0)
    h = jnp.maximum(jnp.dot(h, params["w2"], precision=hp) + params["b2"], 0.0)
    h = jnp.maximum(jnp.dot(h, params["w3"], precision=hp) + params["b3"], 0.0)
    return jnp.dot(h, params["w4"], precision=hp) + params["b4"]


if __name__ == "__main__":
    key = jax.random.PRNGKey(0)
    kp, ks, ka = jax.random.split(key, 3)
    params = init_params(kp)

    # Small, deterministic inputs (single tile).
    B = 8
    s = jax.random.normal(ks, (B, STATE_DIM), dtype=jnp.float32)
    a = jax.random.randint(ka, (B, 1), 0, 3).astype(jnp.float32)
    q_ref = qnet_reference(params, s, a)

    # f32 compute path: tight check against the reference.
    q_f32 = jax.block_until_ready(qnet_forward(params, s, a, compute_dtype=jnp.float32))
    assert q_f32.shape == (B, 1)
    np.testing.assert_allclose(np.asarray(q_f32), np.asarray(q_ref), rtol=1e-4, atol=1e-4)

    # Default perf path: bf16 activations/weights on the MXU, f32 accumulate.
    q_bf16 = jax.block_until_ready(qnet_forward(params, s, a))
    assert q_bf16.shape == (B, 1)
    np.testing.assert_allclose(np.asarray(q_bf16), np.asarray(q_ref), rtol=5e-2, atol=5e-2)

    # Multi-tile + ragged-batch path (grid >= 2, padded remainder).
    ks2, ka2 = jax.random.split(jax.random.PRNGKey(1), 2)
    B2 = 200
    s2 = jax.random.normal(ks2, (B2, STATE_DIM), dtype=jnp.float32)
    a2 = jax.random.randint(ka2, (B2, 1), 0, 3).astype(jnp.float32)
    q2 = jax.block_until_ready(
        qnet_forward(params, s2, a2, compute_dtype=jnp.float32, tile_m=128))
    np.testing.assert_allclose(np.asarray(q2), np.asarray(qnet_reference(params, s2, a2)),
                               rtol=1e-4, atol=1e-4)

    # bf16 multi-tile path with the default (large) tile_m; TM auto-capped so >= 2 tiles.
    q2_bf16 = jax.block_until_ready(qnet_forward(params, s2, a2))
    np.testing.assert_allclose(np.asarray(q2_bf16),
                               np.asarray(qnet_reference(params, s2, a2)),
                               rtol=5e-2, atol=5e-2)

    print("KERNEL_OK")
</pallas_src>

<mosaic_0001>
module attributes {stable_mosaic.version = 11 : i64} {
  func.func @qnet_kernel(%arg0: i32, %arg1: memref<16x8xf32, #tpu.memory_space<vmem>>, %arg2: memref<8x128xf32, #tpu.memory_space<vmem>>, %arg3: memref<128x128xf32, #tpu.memory_space<vmem>>, %arg4: memref<128x128xf32, #tpu.memory_space<vmem>>, %arg5: memref<128x1xf32, #tpu.memory_space<vmem>>, %arg6: memref<4x128xf32, #tpu.memory_space<vmem>>, %arg7: memref<16x1xf32, #tpu.memory_space<vmem>>) attributes {dimension_semantics = [#tpu.dimension_semantics<parallel>], iteration_bounds = array<i64: 1>, scalar_prefetch = 0 : i64, scratch_operands = 0 : i64, tpu.core_type = #tpu.core_type<tc>, window_params = [{transform_indices = @transform_0, window_bounds = array<i64: 16, 8>}, {pipeline_mode = #tpu.pipeline_mode<synchronous>, transform_indices = @transform_1, window_bounds = array<i64: 8, 128>}, {pipeline_mode = #tpu.pipeline_mode<synchronous>, transform_indices = @transform_2, window_bounds = array<i64: 128, 128>}, {pipeline_mode = #tpu.pipeline_mode<synchronous>, transform_indices = @transform_3, window_bounds = array<i64: 128, 128>}, {pipeline_mode = #tpu.pipeline_mode<synchronous>, transform_indices = @transform_4, window_bounds = array<i64: 128, 1>}, {pipeline_mode = #tpu.pipeline_mode<synchronous>, transform_indices = @transform_5, window_bounds = array<i64: 4, 128>}, {transform_indices = @transform_6, window_bounds = array<i64: 16, 1>}]} {
    %c0 = arith.constant 0 : index
    %c0_0 = arith.constant 0 : index
    %0 = vector.load %arg1[%c0, %c0_0] : memref<16x8xf32, #tpu.memory_space<vmem>>, vector<16x8xf32>
    %c0_1 = arith.constant 0 : index
    %c0_2 = arith.constant 0 : index
    %1 = vector.load %arg2[%c0_1, %c0_2] : memref<8x128xf32, #tpu.memory_space<vmem>>, vector<8x128xf32>
    %cst = arith.constant dense<0.000000e+00> : vector<16x128xf32>
    %2 = tpu.matmul %0, %1, %cst {dimension_numbers = #tpu.dot_dimension_numbers<[1], [0], [0], [1], [0, 0, 1, 1], [], []>} : vector<16x8xf32>, vector<8x128xf32>, vector<16x128xf32> -> vector<16x128xf32>
    %c0_3 = arith.constant 0 : index
    %c0_4 = arith.constant 0 : index
    %3 = vector.load %arg6[%c0_3, %c0_4] : memref<4x128xf32, #tpu.memory_space<vmem>>, vector<1x128xf32>
    %4 = vector.broadcast %3 : vector<1x128xf32> to vector<16x128xf32>
    %5 = arith.addf %2, %4 : vector<16x128xf32>
    %cst_5 = arith.constant 0.000000e+00 : f32
    %6 = vector.broadcast %cst_5 : f32 to vector<16x128xf32>
    %7 = arith.maximumf %5, %6 : vector<16x128xf32>
    %c0_6 = arith.constant 0 : index
    %c0_7 = arith.constant 0 : index
    %8 = vector.load %arg3[%c0_6, %c0_7] : memref<128x128xf32, #tpu.memory_space<vmem>>, vector<128x128xf32>
    %cst_8 = arith.constant dense<0.000000e+00> : vector<16x128xf32>
    %9 = tpu.matmul %7, %8, %cst_8 {dimension_numbers = #tpu.dot_dimension_numbers<[1], [0], [0], [1], [0, 0, 1, 1], [], []>} : vector<16x128xf32>, vector<128x128xf32>, vector<16x128xf32> -> vector<16x128xf32>
    %c1 = arith.constant 1 : index
    %c0_9 = arith.constant 0 : index
    %10 = vector.load %arg6[%c1, %c0_9] : memref<4x128xf32, #tpu.memory_space<vmem>>, vector<1x128xf32>
    %11 = vector.broadcast %10 : vector<1x128xf32> to vector<16x128xf32>
    %12 = arith.addf %9, %11 : vector<16x128xf32>
    %cst_10 = arith.constant 0.000000e+00 : f32
    %13 = vector.broadcast %cst_10 : f32 to vector<16x128xf32>
    %14 = arith.maximumf %12, %13 : vector<16x128xf32>
    %c0_11 = arith.constant 0 : index
    %c0_12 = arith.constant 0 : index
    %15 = vector.load %arg4[%c0_11, %c0_12] : memref<128x128xf32, #tpu.memory_space<vmem>>, vector<128x128xf32>
    %cst_13 = arith.constant dense<0.000000e+00> : vector<16x128xf32>
    %16 = tpu.matmul %14, %15, %cst_13 {dimension_numbers = #tpu.dot_dimension_numbers<[1], [0], [0], [1], [0, 0, 1, 1], [], []>} : vector<16x128xf32>, vector<128x128xf32>, vector<16x128xf32> -> vector<16x128xf32>
    %c2 = arith.constant 2 : index
    %c0_14 = arith.constant 0 : index
    %17 = vector.load %arg6[%c2, %c0_14] : memref<4x128xf32, #tpu.memory_space<vmem>>, vector<1x128xf32>
    %18 = vector.broadcast %17 : vector<1x128xf32> to vector<16x128xf32>
    %19 = arith.addf %16, %18 : vector<16x128xf32>
    %cst_15 = arith.constant 0.000000e+00 : f32
    %20 = vector.broadcast %cst_15 : f32 to vector<16x128xf32>
    %21 = arith.maximumf %19, %20 : vector<16x128xf32>
    %c0_16 = arith.constant 0 : index
    %c0_17 = arith.constant 0 : index
    %22 = vector.load %arg5[%c0_16, %c0_17] : memref<128x1xf32, #tpu.memory_space<vmem>>, vector<128x1xf32>
    %cst_18 = arith.constant dense<0.000000e+00> : vector<16x1xf32>
    %23 = tpu.matmul %21, %22, %cst_18 {dimension_numbers = #tpu.dot_dimension_numbers<[1], [0], [0], [1], [0, 0, 1, 1], [], []>} : vector<16x128xf32>, vector<128x1xf32>, vector<16x1xf32> -> vector<16x1xf32>
    %c3 = arith.constant 3 : index
    %c0_19 = arith.constant 0 : index
    %24 = vector.load %arg6[%c3, %c0_19] : memref<4x128xf32, #tpu.memory_space<vmem>>, vector<1x1xf32>
    %25 = vector.broadcast %24 : vector<1x1xf32> to vector<16x1xf32>
    %26 = arith.addf %23, %25 : vector<16x1xf32>
    %c0_20 = arith.constant 0 : index
    %c0_21 = arith.constant 0 : index
    %27 = vector.load %arg7[%c0_20, %c0_21] : memref<16x1xf32, #tpu.memory_space<vmem>>, vector<16x1xf32>
    tpu.vector_store %arg7[%c0_20, %c0_21], %26 {strides = array<i32>} : memref<16x1xf32, #tpu.memory_space<vmem>>, vector<16x1xf32>,
    return
  }
  func.func @transform_0(%arg0: i32) -> (i32, i32) {
    %c0_i32 = arith.constant 0 : i32
    %c0_i32_0 = arith.constant 0 : i32
    return %arg0, %c0_i32 : i32, i32
  }
  func.func @transform_1(%arg0: i32) -> (i32, i32) {
    %c0_i32 = arith.constant 0 : i32
    %c0_i32_0 = arith.constant 0 : i32
    %c0_i32_1 = arith.constant 0 : i32
    return %c0_i32, %c0_i32_0 : i32, i32
  }
  func.func @transform_2(%arg0: i32) -> (i32, i32) {
    %c0_i32 = arith.constant 0 : i32
    %c0_i32_0 = arith.constant 0 : i32
    %c0_i32_1 = arith.constant 0 : i32
    return %c0_i32, %c0_i32_0 : i32, i32
  }
  func.func @transform_3(%arg0: i32) -> (i32, i32) {
    %c0_i32 = arith.constant 0 : i32
    %c0_i32_0 = arith.constant 0 : i32
    %c0_i32_1 = arith.constant 0 : i32
    return %c0_i32, %c0_i32_0 : i32, i32
  }
  func.func @transform_4(%arg0: i32) -> (i32, i32) {
    %c0_i32 = arith.constant 0 : i32
    %c0_i32_0 = arith.constant 0 : i32
    %c0_i32_1 = arith.constant 0 : i32
    return %c0_i32, %c0_i32_0 : i32, i32
  }
  func.func @transform_5(%arg0: i32) -> (i32, i32) {
    %c0_i32 = arith.constant 0 : i32
    %c0_i32_0 = arith.constant 0 : i32
    %c0_i32_1 = arith.constant 0 : i32
    return %c0_i32, %c0_i32_0 : i32, i32
  }
  func.func @transform_6(%arg0: i32) -> (i32, i32) {
    %c0_i32 = arith.constant 0 : i32
    %c0_i32_0 = arith.constant 0 : i32
    return %arg0, %c0_i32 : i32, i32
  }
}

</mosaic_0001>

<llo_original>
// kernel: qnet_forward.1
$region0: #{qnet_forward.1}
  #allocation0 [shape = 'u32[]', space=smem, size = 0x4, offset = 0x4, fixed_abs, tag = 'smem constant byte address 0x4 - core index']
  #allocation1 [shape = 'u32[72,128]{1,0:T(1,128)}', space=vmem, size = 0x9000, scoped, tag = 'internal scratch']
  %s0 = inlined_call_operand.vmem [shape: f32[16,8], index: 0, kind: input, shape index: {}]
  %s1 = inlined_call_operand.vmem [shape: f32[8,128], index: 1, kind: input, shape index: {}]
  %s2 = inlined_call_operand.vmem [shape: f32[128,128], index: 2, kind: input, shape index: {}]
  %s3 = inlined_call_operand.vmem [shape: f32[128,128], index: 3, kind: input, shape index: {}]
  %s4 = inlined_call_operand.vmem [shape: f32[128,1], index: 4, kind: input, shape index: {}]
  %s5 = inlined_call_operand.vmem [shape: f32[4,128], index: 5, kind: input, shape index: {}]
  %s6 = inlined_call_operand.vmem [shape: f32[16,1], index: 6, kind: output, shape index: {}]
  %s7 = sld [smem:[#allocation0]]
  $region34: #{qnet_forward.1} parent=0
    _
  %s9 = ssub.s32 1, %s7
  %s10 = scalar_select 0, %s9, %s7
  // Predicated region
  $region2: #{qnet_forward.1} parent=0 // pred_check
    _
  $region3: #{qnet_forward.1} parent=0 // pred_check_branch
    %12 = sbr.rel (0) target = $region5
  $region4: #{qnet_forward.1} parent=0 // pred_region
    _
  $region5: #{qnet_forward.1} parent=0 // pred_fallthru
    _
  // Predicated region
  $region6: #{qnet_forward.1} parent=0 // pred_check
    _
  $region7: #{qnet_forward.1} parent=0 // pred_check_branch
    %14 = sbr.rel (0) target = $region9
  $region8: #{qnet_forward.1} parent=0 // pred_region
    _
  $region9: #{qnet_forward.1} parent=0 // pred_fallthru
    _
  // Predicated region
  $region10: #{qnet_forward.1} parent=0 // pred_check
    _
  $region11: #{qnet_forward.1} parent=0 // pred_check_branch
    %16 = sbr.rel (0) target = $region13
  $region12: #{qnet_forward.1} parent=0 // pred_region
    _
  $region13: #{qnet_forward.1} parent=0 // pred_fallthru
    _
  // Predicated region
  $region14: #{qnet_forward.1} parent=0 // pred_check
    _
  $region15: #{qnet_forward.1} parent=0 // pred_check_branch
    %18 = sbr.rel (0) target = $region17
  $region16: #{qnet_forward.1} parent=0 // pred_region
    _
  $region17: #{qnet_forward.1} parent=0 // pred_fallthru
    _
  // Predicated region
  $region18: #{qnet_forward.1} parent=0 // pred_check
    _
  $region19: #{qnet_forward.1} parent=0 // pred_check_branch
    %20 = sbr.rel (0) target = $region21
  $region20: #{qnet_forward.1} parent=0 // pred_region
    _
  $region21: #{qnet_forward.1} parent=0 // pred_fallthru
    _
  // Predicated region
  $region22: #{qnet_forward.1} parent=0 // pred_check
    _
  $region23: #{qnet_forward.1} parent=0 // pred_check_branch
    %22 = sbr.rel (0) target = $region25
  $region24: #{qnet_forward.1} parent=0 // pred_region
    _
  $region25: #{qnet_forward.1} parent=0 // pred_fallthru
    _
  %v23 = vld [vmem:[%s0] sm:$0xff]
  %v24 = vld [vmem:[%s0 + $0x8] sm:$0xff]
  %v25 = vld [vmem:[%s1] sm:$0xff]
  %v26 = vld [vmem:[%s5] sm:$0x1]
  %v27 = vperm.slane %v26, 0
  %vm28 = vcmask 64512
  %v30 = vsel %vm28, %v23, 0
  %v33 = vsel %vm28, %v24, 0
  %35 = vmatpush.msra.mxu0 0.0
  %36 = vmatpush.msra.mxu0 0.0
  %37 = vmatpush.msra.mxu0 0.0
  %38 = vmatpush.msra.mxu0 0.0
  %39 = vmatpush.msra.mxu0 0.0
  %40 = vmatpush.msra.mxu0 0.0
  %41 = vmatpush.msra.mxu0 0.0
  %42 = vmatpush.msra.mxu0 0.0
  %43 = vmatpush.msra.mxu0 0.0
  %44 = vmatpush.msra.mxu0 0.0
  %45 = vmatpush.msra.mxu0 0.0
  %46 = vmatpush.msra.mxu0 0.0
  %47 = vmatpush.msra.mxu0 0.0
  %48 = vmatpush.msra.mxu0 0.0
  %49 = vmatpush.msra.mxu0 0.0
  %50 = vmatpush.msra.mxu0 %v25
  %51 = vmatmul.f32.gmra.mxu0 %v30
  %v52 = vpop.f32.mrf.mxu0
  %v53 = vadd.f32 %v27, %v52
  %54 = vmatmul.f32.gmra.mxu0 %v33
  %v55 = vpop.f32.mrf.mxu0
  %v56 = vadd.f32 %v27, %v55
  %57 = vdwg.mxu0
  %v58 = vmax.f32 %v53, 0.0
  %v59 = vmax.f32 %v56, 0.0
  %v60 = vld [vmem:[%s2] sm:$0xff]
  %v61 = vld [vmem:[%s2 + $0x8] sm:$0xff]
  %v62 = vld [vmem:[%s2 + $0x10] sm:$0xff]
  %v63 = vld [vmem:[%s2 + $0x18] sm:$0xff]
  %v64 = vld [vmem:[%s2 + $0x20] sm:$0xff]
  %v65 = vld [vmem:[%s2 + $0x28] sm:$0xff]
  %v66 = vld [vmem:[%s2 + $0x30] sm:$0xff]
  %v67 = vld [vmem:[%s2 + $0x38] sm:$0xff]
  %v68 = vld [vmem:[%s2 + $0x40] sm:$0xff]
  %v69 = vld [vmem:[%s2 + $0x48] sm:$0xff]
  %v70 = vld [vmem:[%s2 + $0x50] sm:$0xff]
  %v71 = vld [vmem:[%s2 + $0x58] sm:$0xff]
  %v72 = vld [vmem:[%s2 + $0x60] sm:$0xff]
  %v73 = vld [vmem:[%s2 + $0x68] sm:$0xff]
  %v74 = vld [vmem:[%s2 + $0x70] sm:$0xff]
  %v75 = vld [vmem:[%s2 + $0x78] sm:$0xff]
  %v76 = vld [vmem:[%s5 + $0x1] sm:$0x1]
  %v77 = vperm.slane %v76, 0
  %78 = vmatpush.msra.mxu0 %v75
  %79 = vmatpush.msra.mxu0 %v74
  %80 = vmatpush.msra.mxu0 %v73
  %81 = vmatpush.msra.mxu0 %v72
  %82 = vmatpush.msra.mxu0 %v71
  %83 = vmatpush.msra.mxu0 %v70
  %84 = vmatpush.msra.mxu0 %v69
  %85 = vmatpush.msra.mxu0 %v68
  %86 = vmatpush.msra.mxu0 %v67
  %87 = vmatpush.msra.mxu0 %v66
  %88 = vmatpush.msra.mxu0 %v65
  %89 = vmatpush.msra.mxu0 %v64
  %90 = vmatpush.msra.mxu0 %v63
  %91 = vmatpush.msra.mxu0 %v62
  %92 = vmatpush.msra.mxu0 %v61
  %93 = vmatpush.msra.mxu0 %v60
  %94 = vmatmul.f32.gmra.mxu0 %v58
  %v95 = vpop.f32.mrf.mxu0
  %v96 = vadd.f32 %v77, %v95
  %97 = vmatmul.f32.gmra.mxu0 %v59
  %v98 = vpop.f32.mrf.mxu0
  %v99 = vadd.f32 %v77, %v98
  %100 = vdwg.mxu0
  %v101 = vmax.f32 %v96, 0.0
  %v102 = vmax.f32 %v99, 0.0
  %v103 = vld [vmem:[%s3] sm:$0xff]
  %v104 = vld [vmem:[%s3 + $0x8] sm:$0xff]
  %v105 = vld [vmem:[%s3 + $0x10] sm:$0xff]
  %v106 = vld [vmem:[%s3 + $0x18] sm:$0xff]
  %v107 = vld [vmem:[%s3 + $0x20] sm:$0xff]
  %v108 = vld [vmem:[%s3 + $0x28] sm:$0xff]
  %v109 = vld [vmem:[%s3 + $0x30] sm:$0xff]
  %v110 = vld [vmem:[%s3 + $0x38] sm:$0xff]
  %v111 = vld [vmem:[%s3 + $0x40] sm:$0xff]
  %v112 = vld [vmem:[%s3 + $0x48] sm:$0xff]
  %v113 = vld [vmem:[%s3 + $0x50] sm:$0xff]
  %v114 = vld [vmem:[%s3 + $0x58] sm:$0xff]
  %v115 = vld [vmem:[%s3 + $0x60] sm:$0xff]
  %v116 = vld [vmem:[%s3 + $0x68] sm:$0xff]
  %v117 = vld [vmem:[%s3 + $0x70] sm:$0xff]
  %v118 = vld [vmem:[%s3 + $0x78] sm:$0xff]
  %v119 = vld [vmem:[%s5 + $0x2] sm:$0x1]
  %v120 = vperm.slane %v119, 0
  %121 = vmatpush.msra.mxu0 %v118
  %122 = vmatpush.msra.mxu0 %v117
  %123 = vmatpush.msra.mxu0 %v116
  %124 = vmatpush.msra.mxu0 %v115
  %125 = vmatpush.msra.mxu0 %v114
  %126 = vmatpush.msra.mxu0 %v113
  %127 = vmatpush.msra.mxu0 %v112
  %128 = vmatpush.msra.mxu0 %v111
  %129 = vmatpush.msra.mxu0 %v110
  %130 = vmatpush.msra.mxu0 %v109
  %131 = vmatpush.msra.mxu0 %v108
  %132 = vmatpush.msra.mxu0 %v107
  %133 = vmatpush.msra.mxu0 %v106
  %134 = vmatpush.msra.mxu0 %v105
  %135 = vmatpush.msra.mxu0 %v104
  %136 = vmatpush.msra.mxu0 %v103
  %137 = vmatmul.f32.gmra.mxu0 %v101
  %v138 = vpop.f32.mrf.mxu0
  %v139 = vadd.f32 %v120, %v138
  %140 = vmatmul.f32.gmra.mxu0 %v102
  %v141 = vpop.f32.mrf.mxu0
  %v142 = vadd.f32 %v120, %v141
  %143 = vdwg.mxu0
  %v144 = vmax.f32 %v139, 0.0
  %v145 = vmax.f32 %v142, 0.0
  %v146 = vld [vmem:[%s4] sm:$0xff]
  %v147 = vld [vmem:[%s4 + $0x8] sm:$0xff]
  %v148 = vld [vmem:[%s4 + $0x10] sm:$0xff]
  %v149 = vld [vmem:[%s4 + $0x18] sm:$0xff]
  %v150 = vld [vmem:[%s4 + $0x20] sm:$0xff]
  %v151 = vld [vmem:[%s4 + $0x28] sm:$0xff]
  %v152 = vld [vmem:[%s4 + $0x30] sm:$0xff]
  %v153 = vld [vmem:[%s4 + $0x38] sm:$0xff]
  %v154 = vld [vmem:[%s4 + $0x40] sm:$0xff]
  %v155 = vld [vmem:[%s4 + $0x48] sm:$0xff]
  %v156 = vld [vmem:[%s4 + $0x50] sm:$0xff]
  %v157 = vld [vmem:[%s4 + $0x58] sm:$0xff]
  %v158 = vld [vmem:[%s4 + $0x60] sm:$0xff]
  %v159 = vld [vmem:[%s4 + $0x68] sm:$0xff]
  %v160 = vld [vmem:[%s4 + $0x70] sm:$0xff]
  %v161 = vld [vmem:[%s4 + $0x78] sm:$0xff]
  %v162 = vld [vmem:[%s5 + $0x3] sm:$0x1]
  %v163 = vperm.slane %v162, 0
  %164 = vmatpush.msra.mxu0 %v161
  %165 = vmatpush.msra.mxu0 %v160
  %166 = vmatpush.msra.mxu0 %v159
  %167 = vmatpush.msra.mxu0 %v158
  %168 = vmatpush.msra.mxu0 %v157
  %169 = vmatpush.msra.mxu0 %v156
  %170 = vmatpush.msra.mxu0 %v155
  %171 = vmatpush.msra.mxu0 %v154
  %172 = vmatpush.msra.mxu0 %v153
  %173 = vmatpush.msra.mxu0 %v152
  %174 = vmatpush.msra.mxu0 %v151
  %175 = vmatpush.msra.mxu0 %v150
  %176 = vmatpush.msra.mxu0 %v149
  %177 = vmatpush.msra.mxu0 %v148
  %178 = vmatpush.msra.mxu0 %v147
  %179 = vmatpush.msra.mxu0 %v146
  %180 = vmatmul.f32.gmra.mxu0 %v144
  %v181 = vpop.f32.mrf.mxu0
  %v182 = vadd.f32 %v163, %v181
  %183 = vmatmul.f32.gmra.mxu0 %v145
  %v184 = vpop.f32.mrf.mxu0
  %v185 = vadd.f32 %v163, %v184
  %186 = vdwg.mxu0
  %vm187 = vcmask 7168
  %188 = vst.msk [vmem:[%s6] sm:$0xff] %vm187, %v182
  %189 = vst.msk [vmem:[%s6 + $0x8] sm:$0xff] %vm187, %v185
  // Predicated region
  $region26: #{qnet_forward.1} parent=0 // pred_check
    _
  $region27: #{qnet_forward.1} parent=0 // pred_check_branch
    %191 = sbr.rel (0) target = $region29
  $region28: #{qnet_forward.1} parent=0 // pred_region
    _
  $region29: #{qnet_forward.1} parent=0 // pred_fallthru
    _
  // Predicated region
  $region30: #{qnet_forward.1} parent=0 // pred_check
    _
  $region31: #{qnet_forward.1} parent=0 // pred_check_branch
    %193 = sbr.rel (0) target = $region33
  $region32: #{qnet_forward.1} parent=0 // pred_region
    _
  $region33: #{qnet_forward.1} parent=0 // pred_fallthru
    _

</llo_original>
